<compile_context>
chip_gen: v6e
topology: v6e:2x2x1
jax: 0.10.0
libtpu: 0.0.40
codegen_flags: <defaults>
</compile_context>

<pallas_src>
import functools

import jax
import jax.numpy as jnp
from jax.experimental import pallas as pl
from jax.experimental.pallas import tpu as pltpu


def _beta_intersection_kernel(
    alpha_ref,   # (TB, N, D)  f32
    beta_ref,    # (TB, N, D)  f32
    w1a_ref,     # (D, 2D)     bf16  first half of layer1.weight.T  (alpha)
    w1b_ref,     # (D, 2D)     bf16  second half of layer1.weight.T (beta)
    b1_ref,      # (1, 2D)     f32
    w2_ref,      # (2D, D)     bf16  layer2.weight.T
    b2_ref,      # (1, D)      f32
    a_out_ref,   # (TB, D)     f32
    b_out_ref,   # (TB, D)     f32
):
    tb, n, d = alpha_ref.shape

    alpha = alpha_ref[...]                      # (TB, N, D) f32
    beta = beta_ref[...]                        # (TB, N, D) f32

    # Fold batch+conjunct into one big M dimension for the MXU.  N % 8 == 0
    # keeps this on sublane-tile boundaries (no relayout copies).
    alpha2 = alpha.reshape(tb * n, d).astype(jnp.bfloat16)
    beta2 = beta.reshape(tb * n, d).astype(jnp.bfloat16)

    # layer1: Linear(2D -> 2D) on concat([alpha, beta], -1), as a split matmul
    # (avoids an XLU lane-shuffle concat at small, non-128-aligned D).
    # bf16 operands (MXU-native on v5e/v6e/v7x), f32 accumulation.
    h = (
        jnp.dot(alpha2, w1a_ref[...], preferred_element_type=jnp.float32)
        + jnp.dot(beta2, w1b_ref[...], preferred_element_type=jnp.float32)
        + b1_ref[...]
    )
    h = jnp.maximum(h, 0.0)                     # relu -> (TB*N, 2D) f32

    # layer2: Linear(2D -> D), bf16 operand again.
    logits = (
        jnp.dot(h.astype(jnp.bfloat16), w2_ref[...],
                preferred_element_type=jnp.float32)
        + b2_ref[...]
    ).reshape(tb, n, d)                         # (TB, N, D) f32

    # softmax over the conjunct axis (dim=1 of (B, N, D)), all in f32.
    m = jnp.max(logits, axis=1, keepdims=True)
    e = jnp.exp(logits - m)
    denom = jnp.sum(e, axis=1, keepdims=True)
    att = e * pl.reciprocal(denom, approx=True)  # EUP vrcp, co-issues with VPU

    # weighted sums over the conjunct axis.
    a_out_ref[...] = jnp.sum(att * alpha, axis=1)
    b_out_ref[...] = jnp.sum(att * beta, axis=1)


def prepare_beta_intersection_params(w1, b1, w2, b2):
    """Pre-transpose / split / bf16-cast PyTorch-layout Linear weights ONCE.

    w1: (2D, 2D) [out, in], b1: (2D,), w2: (D, 2D) [out, in], b2: (D,).
    Weights are stored bf16 (MXU-native); biases stay f32 (added post-matmul).
    """
    two_d = w1.shape[0]
    d = two_d // 2
    assert w1.shape == (two_d, two_d) and w2.shape == (d, two_d)
    w1_t = w1.T                                  # (2D, 2D), cols = out features
    w1a = w1_t[:d, :].astype(jnp.bfloat16)       # (D, 2D) -> multiplies alpha
    w1b = w1_t[d:, :].astype(jnp.bfloat16)       # (D, 2D) -> multiplies beta
    w2_t = w2.T.astype(jnp.bfloat16)             # (2D, D)
    b1_2d = b1.reshape(1, two_d).astype(jnp.float32)
    b2_2d = b2.reshape(1, d).astype(jnp.float32)
    return w1a, w1b, b1_2d, w2_t, b2_2d


def _round_up(x, m):
    return -(-x // m) * m


def _pick_tb(batch, n, d, *, target_rows=1024, pipeline_vmem_budget=12 << 20):
    """Batch tile size.

    Targets TB*N ~= target_rows per grid step (amortizes per-step overhead and
    fills the MXU M dimension), capped by a lane-padding-aware VMEM budget for
    the pipelined buffers, and never over-padding small batches.
    """
    d_lanes = _round_up(max(d, 1), 128)          # f32 rows pad to 128 lanes
    # Pipelined VMEM bytes per batch row:
    #   2 inputs x 2 buffers x (N, d_lanes) f32  +  2 outputs x 2 buffers x (d_lanes,) f32
    bytes_per_row = (2 * 2 * n + 2 * 2) * d_lanes * 4

    tb = _round_up(pl.cdiv(target_rows, max(n, 1)), 8)          # amortization target
    tb = min(tb, max(8, (pipeline_vmem_budget // bytes_per_row) // 8 * 8))

    if tb < batch:
        return tb                                # >= 2 grid steps already
    if batch >= 64:
        # Whole batch would fit in one step: split into 2 so the "parallel"
        # grid axis can use both TensorCores on v7x (padding cost is small).
        return _round_up(pl.cdiv(batch, 2), 8)
    # Tiny batch: take it all in one step with an exact-size block -> no padding.
    return max(1, batch)


@functools.partial(jax.jit, static_argnames=("tb",))
def beta_intersection(alpha, beta, params, tb=None):
    """alpha, beta: (B, N, D) f32; params from prepare_beta_intersection_params."""
    B, N, D = alpha.shape
    assert beta.shape == (B, N, D)
    w1a, w1b, b1_2d, w2_t, b2_2d = params
    assert w1a.shape == (D, 2 * D) and w2_t.shape == (2 * D, D)

    if tb is None:
        tb = _pick_tb(B, N, D)

    # Pad the batch to a multiple of TB; zero rows are harmless (their outputs
    # are sliced off below).  For small B, tb == B and there is no padding.
    B_pad = pl.cdiv(B, tb) * tb
    if B_pad != B:
        pad = ((0, B_pad - B), (0, 0), (0, 0))
        alpha_p = jnp.pad(alpha, pad)
        beta_p = jnp.pad(beta, pad)
    else:
        alpha_p, beta_p = alpha, beta

    grid = (B_pad // tb,)

    grid_spec = pltpu.PrefetchScalarGridSpec(
        num_scalar_prefetch=0,
        grid=grid,
        in_specs=[
            pl.BlockSpec((tb, N, D), lambda g: (g, 0, 0)),      # alpha
            pl.BlockSpec((tb, N, D), lambda g: (g, 0, 0)),      # beta
            pl.BlockSpec((D, 2 * D), lambda g: (0, 0)),          # w1a (resident)
            pl.BlockSpec((D, 2 * D), lambda g: (0, 0)),          # w1b (resident)
            pl.BlockSpec((1, 2 * D), lambda g: (0, 0)),          # b1
            pl.BlockSpec((2 * D, D), lambda g: (0, 0)),          # w2  (resident)
            pl.BlockSpec((1, D), lambda g: (0, 0)),              # b2
        ],
        out_specs=[
            pl.BlockSpec((tb, D), lambda g: (g, 0)),
            pl.BlockSpec((tb, D), lambda g: (g, 0)),
        ],
    )

    # Advisory cost estimate for XLA scheduling around this (small) kernel.
    flops = 12 * B_pad * N * D * D                     # two K=D + one K=2D matmul
    transcendentals = B_pad * N * D + B_pad * D        # exp + reciprocal
    bytes_accessed = (4 * 2 * B_pad * N * D            # f32 inputs
                      + 2 * 6 * D * D                  # bf16 weights
                      + 4 * 3 * D                      # biases
                      + 4 * 2 * B_pad * D)             # f32 outputs

    a_out, b_out = pl.pallas_call(
        _beta_intersection_kernel,
        out_shape=(
            jax.ShapeDtypeStruct((B_pad, D), jnp.float32),
            jax.ShapeDtypeStruct((B_pad, D), jnp.float32),
        ),
        grid_spec=grid_spec,
        compiler_params=pltpu.CompilerParams(
            dimension_semantics=("parallel",),
            # Explicit scoped-VMEM ceiling: safe on v7x (64 MiB physical) and
            # lifts v5e's 16 MiB default so the larger tiles never fall back
            # to tiny pipelined buffers.
            vmem_limit_bytes=32 * 1024 * 1024,
        ),
        cost_estimate=pl.CostEstimate(
            flops=flops,
            transcendentals=transcendentals,
            bytes_accessed=bytes_accessed,
        ),
    )(alpha_p, beta_p, w1a, w1b, b1_2d, w2_t, b2_2d)

    return a_out[:B], b_out[:B]


def _reference_f32(alpha, beta, w1, b1, w2, b2):
    """Pure-JAX f32 reference matching the PyTorch forward exactly."""
    all_emb = jnp.concatenate([alpha, beta], axis=-1)
    h = jax.nn.relu(all_emb @ w1.T + b1)
    att = jax.nn.softmax(h @ w2.T + b2, axis=1)
    a = jnp.sum(att * alpha, axis=1)
    b = jnp.sum(att * beta, axis=1)
    return a, b


def _reference_bf16(alpha, beta, params):
    """Reference mirroring the kernel's bf16-matmul / f32-softmax numerics."""
    w1a, w1b, b1_2d, w2_t, b2_2d = params
    B, N, D = alpha.shape
    a2 = alpha.reshape(B * N, D).astype(jnp.bfloat16)
    b2_ = beta.reshape(B * N, D).astype(jnp.bfloat16)
    h = (jnp.dot(a2, w1a, preferred_element_type=jnp.float32)
         + jnp.dot(b2_, w1b, preferred_element_type=jnp.float32) + b1_2d)
    h = jnp.maximum(h, 0.0)
    logits = (jnp.dot(h.astype(jnp.bfloat16), w2_t,
                      preferred_element_type=jnp.float32) + b2_2d).reshape(B, N, D)
    att = jax.nn.softmax(logits, axis=1)
    return jnp.sum(att * alpha, axis=1), jnp.sum(att * beta, axis=1)


if __name__ == "__main__":
    B, N, D = 2, 8, 32  # batch, num_conjuncts, dim

    key = jax.random.PRNGKey(0)
    k_a, k_b, k_w1, k_b1, k_w2, k_b2 = jax.random.split(key, 6)

    alpha = jax.random.uniform(k_a, (B, N, D), jnp.float32, 0.05, 1.0)
    beta = jax.random.uniform(k_b, (B, N, D), jnp.float32, 0.05, 1.0)

    # Deterministic parameter init (xavier_uniform weights, PyTorch-default-style biases).
    bound1 = (6.0 / (2 * D + 2 * D)) ** 0.5
    w1 = jax.random.uniform(k_w1, (2 * D, 2 * D), jnp.float32, -bound1, bound1)
    b1 = jax.random.uniform(k_b1, (2 * D,), jnp.float32,
                            -1.0 / (2 * D) ** 0.5, 1.0 / (2 * D) ** 0.5)
    bound2 = (6.0 / (2 * D + D)) ** 0.5
    w2 = jax.random.uniform(k_w2, (D, 2 * D), jnp.float32, -bound2, bound2)
    b2 = jax.random.uniform(k_b2, (D,), jnp.float32,
                            -1.0 / (2 * D) ** 0.5, 1.0 / (2 * D) ** 0.5)

    # Pre-transposed / bf16-cast weights computed once (not per forward call).
    params = prepare_beta_intersection_params(w1, b1, w2, b2)

    a_out, b_out = beta_intersection(alpha, beta, params)
    jax.block_until_ready((a_out, b_out))

    # Tight check vs a reference with identical bf16-matmul numerics
    # (residual error: approx reciprocal + MXU accumulation order).
    a_rb, b_rb = _reference_bf16(alpha, beta, params)
    assert jnp.allclose(a_out, a_rb, atol=3e-3, rtol=3e-3)
    assert jnp.allclose(b_out, b_rb, atol=3e-3, rtol=3e-3)

    # Looser check vs the exact f32 PyTorch-equivalent forward
    # (tolerance = bf16 matmul error budget).
    a_rf, b_rf = _reference_f32(alpha, beta, w1, b1, w2, b2)
    assert jnp.allclose(a_out, a_rf, atol=2e-2, rtol=2e-2)
    assert jnp.allclose(b_out, b_rf, atol=2e-2, rtol=2e-2)

    print("KERNEL_OK")
</pallas_src>

<mosaic_0001>
module attributes {stable_mosaic.version = 11 : i64} {
  func.func @_beta_intersection_kernel(%arg0: i32, %arg1: memref<2x8x32xf32, #tpu.memory_space<vmem>>, %arg2: memref<2x8x32xf32, #tpu.memory_space<vmem>>, %arg3: memref<32x64xbf16, #tpu.memory_space<vmem>>, %arg4: memref<32x64xbf16, #tpu.memory_space<vmem>>, %arg5: memref<1x64xf32, #tpu.memory_space<vmem>>, %arg6: memref<64x32xbf16, #tpu.memory_space<vmem>>, %arg7: memref<1x32xf32, #tpu.memory_space<vmem>>, %arg8: memref<2x32xf32, #tpu.memory_space<vmem>>, %arg9: memref<2x32xf32, #tpu.memory_space<vmem>>) attributes {dimension_semantics = [#tpu.dimension_semantics<parallel>], iteration_bounds = array<i64: 1>, scalar_prefetch = 0 : i64, scratch_operands = 0 : i64, tpu.core_type = #tpu.core_type<tc>, window_params = [{transform_indices = @transform_0, window_bounds = array<i64: 2, 8, 32>}, {transform_indices = @transform_1, window_bounds = array<i64: 2, 8, 32>}, {pipeline_mode = #tpu.pipeline_mode<synchronous>, transform_indices = @transform_2, window_bounds = array<i64: 32, 64>}, {pipeline_mode = #tpu.pipeline_mode<synchronous>, transform_indices = @transform_3, window_bounds = array<i64: 32, 64>}, {pipeline_mode = #tpu.pipeline_mode<synchronous>, transform_indices = @transform_4, window_bounds = array<i64: 1, 64>}, {pipeline_mode = #tpu.pipeline_mode<synchronous>, transform_indices = @transform_5, window_bounds = array<i64: 64, 32>}, {pipeline_mode = #tpu.pipeline_mode<synchronous>, transform_indices = @transform_6, window_bounds = array<i64: 1, 32>}, {transform_indices = @transform_7, window_bounds = array<i64: 2, 32>}, {transform_indices = @transform_8, window_bounds = array<i64: 2, 32>}]} {
    %c0 = arith.constant 0 : index
    %c0_0 = arith.constant 0 : index
    %c0_1 = arith.constant 0 : index
    %0 = vector.load %arg1[%c0, %c0_0, %c0_1] : memref<2x8x32xf32, #tpu.memory_space<vmem>>, vector<2x8x32xf32>
    %c0_2 = arith.constant 0 : index
    %c0_3 = arith.constant 0 : index
    %c0_4 = arith.constant 0 : index
    %1 = vector.load %arg2[%c0_2, %c0_3, %c0_4] : memref<2x8x32xf32, #tpu.memory_space<vmem>>, vector<2x8x32xf32>
    %2 = vector.shape_cast %0 : vector<2x8x32xf32> to vector<16x32xf32>
    %3 = arith.truncf %2 : vector<16x32xf32> to vector<16x32xbf16>
    %4 = vector.shape_cast %1 : vector<2x8x32xf32> to vector<16x32xf32>
    %5 = arith.truncf %4 : vector<16x32xf32> to vector<16x32xbf16>
    %c0_5 = arith.constant 0 : index
    %c0_6 = arith.constant 0 : index
    %6 = vector.load %arg3[%c0_5, %c0_6] : memref<32x64xbf16, #tpu.memory_space<vmem>>, vector<32x64xbf16>
    %cst = arith.constant dense<0.000000e+00> : vector<16x64xf32>
    %7 = tpu.matmul %3, %6, %cst {dimension_numbers = #tpu.dot_dimension_numbers<[1], [0], [0], [1], [0, 0, 1, 1], [], []>} : vector<16x32xbf16>, vector<32x64xbf16>, vector<16x64xf32> -> vector<16x64xf32>
    %c0_7 = arith.constant 0 : index
    %c0_8 = arith.constant 0 : index
    %8 = vector.load %arg4[%c0_7, %c0_8] : memref<32x64xbf16, #tpu.memory_space<vmem>>, vector<32x64xbf16>
    %cst_9 = arith.constant dense<0.000000e+00> : vector<16x64xf32>
    %9 = tpu.matmul %5, %8, %cst_9 {dimension_numbers = #tpu.dot_dimension_numbers<[1], [0], [0], [1], [0, 0, 1, 1], [], []>} : vector<16x32xbf16>, vector<32x64xbf16>, vector<16x64xf32> -> vector<16x64xf32>
    %10 = arith.addf %7, %9 : vector<16x64xf32>
    %c0_10 = arith.constant 0 : index
    %c0_11 = arith.constant 0 : index
    %11 = vector.load %arg5[%c0_10, %c0_11] : memref<1x64xf32, #tpu.memory_space<vmem>>, vector<1x64xf32>
    %12 = vector.broadcast %11 : vector<1x64xf32> to vector<16x64xf32>
    %13 = arith.addf %10, %12 : vector<16x64xf32>
    %cst_12 = arith.constant 0.000000e+00 : f32
    %14 = vector.broadcast %cst_12 : f32 to vector<16x64xf32>
    %15 = arith.maximumf %13, %14 : vector<16x64xf32>
    %16 = arith.truncf %15 : vector<16x64xf32> to vector<16x64xbf16>
    %c0_13 = arith.constant 0 : index
    %c0_14 = arith.constant 0 : index
    %17 = vector.load %arg6[%c0_13, %c0_14] : memref<64x32xbf16, #tpu.memory_space<vmem>>, vector<64x32xbf16>
    %cst_15 = arith.constant dense<0.000000e+00> : vector<16x32xf32>
    %18 = tpu.matmul %16, %17, %cst_15 {dimension_numbers = #tpu.dot_dimension_numbers<[1], [0], [0], [1], [0, 0, 1, 1], [], []>} : vector<16x64xbf16>, vector<64x32xbf16>, vector<16x32xf32> -> vector<16x32xf32>
    %c0_16 = arith.constant 0 : index
    %c0_17 = arith.constant 0 : index
    %19 = vector.load %arg7[%c0_16, %c0_17] : memref<1x32xf32, #tpu.memory_space<vmem>>, vector<1x32xf32>
    %20 = vector.broadcast %19 : vector<1x32xf32> to vector<16x32xf32>
    %21 = arith.addf %18, %20 : vector<16x32xf32>
    %22 = vector.shape_cast %21 : vector<16x32xf32> to vector<2x8x32xf32>
    %cst_18 = arith.constant dense<0xFF800000> : vector<2x32xf32>
    %23 = vector.multi_reduction <maximumf>, %22, %cst_18 [1] : vector<2x8x32xf32> to vector<2x32xf32>
    %24 = vector.shape_cast %23 : vector<2x32xf32> to vector<2x1x32xf32>
    %25 = vector.broadcast %24 : vector<2x1x32xf32> to vector<2x8x32xf32>
    %26 = arith.subf %22, %25 : vector<2x8x32xf32>
    %27 = math.exp %26 : vector<2x8x32xf32>
    %cst_19 = arith.constant dense<0.000000e+00> : vector<2x32xf32>
    %28 = vector.multi_reduction <add>, %27, %cst_19 [1] : vector<2x8x32xf32> to vector<2x32xf32>
    %29 = vector.shape_cast %28 : vector<2x32xf32> to vector<2x1x32xf32>
    %30 = tpu.reciprocal %29 {approx = true} : vector<2x1x32xf32> -> vector<2x1x32xf32>
    %31 = vector.broadcast %30 : vector<2x1x32xf32> to vector<2x8x32xf32>
    %32 = arith.mulf %27, %31 : vector<2x8x32xf32>
    %33 = arith.mulf %32, %0 : vector<2x8x32xf32>
    %cst_20 = arith.constant dense<0.000000e+00> : vector<2x32xf32>
    %34 = vector.multi_reduction <add>, %33, %cst_20 [1] : vector<2x8x32xf32> to vector<2x32xf32>
    %c0_21 = arith.constant 0 : index
    %c0_22 = arith.constant 0 : index
    %35 = vector.load %arg8[%c0_21, %c0_22] : memref<2x32xf32, #tpu.memory_space<vmem>>, vector<2x32xf32>
    tpu.vector_store %arg8[%c0_21, %c0_22], %34 {strides = array<i32>} : memref<2x32xf32, #tpu.memory_space<vmem>>, vector<2x32xf32>,
    %36 = arith.mulf %32, %1 : vector<2x8x32xf32>
    %cst_23 = arith.constant dense<0.000000e+00> : vector<2x32xf32>
    %37 = vector.multi_reduction <add>, %36, %cst_23 [1] : vector<2x8x32xf32> to vector<2x32xf32>
    %c0_24 = arith.constant 0 : index
    %c0_25 = arith.constant 0 : index
    %38 = vector.load %arg9[%c0_24, %c0_25] : memref<2x32xf32, #tpu.memory_space<vmem>>, vector<2x32xf32>
    tpu.vector_store %arg9[%c0_24, %c0_25], %37 {strides = array<i32>} : memref<2x32xf32, #tpu.memory_space<vmem>>, vector<2x32xf32>,
    return
  }
  func.func @transform_0(%arg0: i32) -> (i32, i32, i32) {
    %c0_i32 = arith.constant 0 : i32
    %c0_i32_0 = arith.constant 0 : i32
    %c0_i32_1 = arith.constant 0 : i32
    return %arg0, %c0_i32, %c0_i32_0 : i32, i32, i32
  }
  func.func @transform_1(%arg0: i32) -> (i32, i32, i32) {
    %c0_i32 = arith.constant 0 : i32
    %c0_i32_0 = arith.constant 0 : i32
    %c0_i32_1 = arith.constant 0 : i32
    return %arg0, %c0_i32, %c0_i32_0 : i32, i32, i32
  }
  func.func @transform_2(%arg0: i32) -> (i32, i32) {
    %c0_i32 = arith.constant 0 : i32
    %c0_i32_0 = arith.constant 0 : i32
    %c0_i32_1 = arith.constant 0 : i32
    return %c0_i32, %c0_i32_0 : i32, i32
  }
  func.func @transform_3(%arg0: i32) -> (i32, i32) {
    %c0_i32 = arith.constant 0 : i32
    %c0_i32_0 = arith.constant 0 : i32
    %c0_i32_1 = arith.constant 0 : i32
    return %c0_i32, %c0_i32_0 : i32, i32
  }
  func.func @transform_4(%arg0: i32) -> (i32, i32) {
    %c0_i32 = arith.constant 0 : i32
    %c0_i32_0 = arith.constant 0 : i32
    %c0_i32_1 = arith.constant 0 : i32
    return %c0_i32, %c0_i32_0 : i32, i32
  }
  func.func @transform_5(%arg0: i32) -> (i32, i32) {
    %c0_i32 = arith.constant 0 : i32
    %c0_i32_0 = arith.constant 0 : i32
    %c0_i32_1 = arith.constant 0 : i32
    return %c0_i32, %c0_i32_0 : i32, i32
  }
  func.func @transform_6(%arg0: i32) -> (i32, i32) {
    %c0_i32 = arith.constant 0 : i32
    %c0_i32_0 = arith.constant 0 : i32
    %c0_i32_1 = arith.constant 0 : i32
    return %c0_i32, %c0_i32_0 : i32, i32
  }
  func.func @transform_7(%arg0: i32) -> (i32, i32) {
    %c0_i32 = arith.constant 0 : i32
    %c0_i32_0 = arith.constant 0 : i32
    return %arg0, %c0_i32 : i32, i32
  }
  func.func @transform_8(%arg0: i32) -> (i32, i32) {
    %c0_i32 = arith.constant 0 : i32
    %c0_i32_0 = arith.constant 0 : i32
    return %arg0, %c0_i32 : i32, i32
  }
}

</mosaic_0001>

<llo_original>
// kernel: beta_intersection.1
$region0: #{beta_intersection.1}
  #allocation0 [shape = 'u32[]', space=smem, size = 0x4, offset = 0x4, fixed_abs, tag = 'smem constant byte address 0x4 - core index']
  #allocation1 [shape = 'u32[144,128]{1,0:T(1,128)}', space=vmem, size = 0x12000, scoped, tag = 'internal scratch']
  %s0 = inlined_call_operand.vmem [shape: f32[2,8,32], index: 0, kind: input, shape index: {}]
  %s1 = inlined_call_operand.vmem [shape: f32[2,8,32], index: 1, kind: input, shape index: {}]
  %s2 = inlined_call_operand.vmem [shape: bf16[32,64], index: 2, kind: input, shape index: {}]
  %s3 = inlined_call_operand.hbm [shape: bf16[32,64], index: 3, kind: input, shape index: {}]
  %s4 = inlined_call_operand.vmem [shape: f32[1,64], index: 4, kind: input, shape index: {}]
  %s5 = inlined_call_operand.vmem [shape: bf16[64,32], index: 5, kind: input, shape index: {}]
  %s6 = inlined_call_operand.vmem [shape: f32[1,32], index: 6, kind: input, shape index: {}]
  %s7 = inlined_call_operand.hbm [shape: f32[2,32], index: 7, kind: output, shape index: {0}]
  %s8 = inlined_call_operand.hbm [shape: f32[2,32], index: 8, kind: output, shape index: {1}]
  %9 = xla_tuple %s7, %s8
  %s10 = sld [smem:[#allocation0]]
  $region50: #{beta_intersection.1} parent=0
    _
  %s12 = ssub.s32 1, %s10
  %s13 = scalar_select 0, %s12, %s10
  $region1: #{beta_intersection.1} parent=0
    #allocation2 [shape = 'u8[8192]{0}', space=vmem, size = 0x2000, scoped, tag = 'input window, operand 3, single buffered']
    #allocation3 [shape = 's32[1]{0}', space=sflag, size = 0x4, scoped, tag = 'scoped memory for beta_intersection.1']
    #allocation4 [shape = 's32[1]{0}', space=sflag, size = 0x4, scoped, tag = 'scoped memory for beta_intersection.1']
    #allocation5 [shape = 'u8[1024]{0}', space=vmem, size = 0x400, scoped, tag = 'output window, operand 0, single buffered']
    #allocation6 [shape = 'u8[1024]{0}', space=vmem, size = 0x400, scoped, tag = 'output window, operand 1, single buffered']
    #allocation7 [shape = 's32[1]{0}', space=sflag, size = 0x4, scoped, tag = 'scoped memory for beta_intersection.1']
    %14 = vsyncpa [#allocation3], 0
    %15 = vsyncpa [#allocation4], 0
    %16 = vsyncpa [#allocation7], 0
    // Predicated region
    $region2: #{beta_intersection.1} parent=1 // pred_check
      _
    $region3: #{beta_intersection.1} parent=1 // pred_check_branch
      %18 = sbr.rel (0) target = $region5
    $region4: #{beta_intersection.1} parent=1 // pred_region
      _
    $region5: #{beta_intersection.1} parent=1 // pred_fallthru
      _
    // Predicated region
    $region6: #{beta_intersection.1} parent=1 // pred_check
      _
    $region7: #{beta_intersection.1} parent=1 // pred_check_branch
      %20 = sbr.rel (0) target = $region9
    $region8: #{beta_intersection.1} parent=1 // pred_region
      _
    $region9: #{beta_intersection.1} parent=1 // pred_fallthru
      _
    // Predicated region
    $region10: #{beta_intersection.1} parent=1 // pred_check
      _
    $region11: #{beta_intersection.1} parent=1 // pred_check_branch
      %22 = sbr.rel (0) target = $region13
    $region12: #{beta_intersection.1} parent=1 // pred_region
      _
    $region13: #{beta_intersection.1} parent=1 // pred_fallthru
      _
    // Predicated region
    $region14: #{beta_intersection.1} parent=1 // pred_check
      _
    $region15: #{beta_intersection.1} parent=1 // pred_check_branch
      %24 = sbr.rel (0) target = $region17
    $region16: #{beta_intersection.1} parent=1 // pred_region
      %s26 = ssub.s32 256, 256
      %27 = vsyncadd [#allocation3], %s26
      %s28 = sshll.u32 [#allocation2], 4
      %s29 = int_to_ptr.vmem [resolvable:$true] %s28
      %34 = dma.hbm_to_vmem [thread:$0]  %s3, 256, %s29, [#allocation3], 64, 64, 4
    $region17: #{beta_intersection.1} parent=1 // pred_fallthru
      _
    // Predicated region
    $region18: #{beta_intersection.1} parent=1 // pred_check
      _
    $region19: #{beta_intersection.1} parent=1 // pred_check_branch
      %36 = sbr.rel (0) target = $region21
    $region20: #{beta_intersection.1} parent=1 // pred_region
      _
    $region21: #{beta_intersection.1} parent=1 // pred_fallthru
      _
    // Predicated region
    $region22: #{beta_intersection.1} parent=1 // pred_check
      _
    $region23: #{beta_intersection.1} parent=1 // pred_check_branch
      %38 = sbr.rel (0) target = $region25
    $region24: #{beta_intersection.1} parent=1 // pred_region
      _
    $region25: #{beta_intersection.1} parent=1 // pred_fallthru
      _
    // Predicated region
    $region26: #{beta_intersection.1} parent=1 // pred_check
      _
    $region27: #{beta_intersection.1} parent=1 // pred_check_branch
      %40 = sbr.rel (0) target = $region29
    $region28: #{beta_intersection.1} parent=1 // pred_region
      _
    $region29: #{beta_intersection.1} parent=1 // pred_fallthru
      _
    // Predicated region
    $region30: #{beta_intersection.1} parent=1 // pred_check
      _
    $region31: #{beta_intersection.1} parent=1 // pred_check_branch
      %42 = sbr.rel (0) target = $region33
    $region32: #{beta_intersection.1} parent=1 // pred_region
      %43 = dma.done [#allocation3], 256
    $region33: #{beta_intersection.1} parent=1 // pred_fallthru
      _
    %v45 = vld [vmem:[%s0] sm:$0xff]
    %v46 = vld [vmem:[%s0 + $0x8] sm:$0xff]
    %v47 = vld [vmem:[%s1] sm:$0xff]
    %v48 = vld [vmem:[%s1 + $0x8] sm:$0xff]
    %v49 = vpack.c.bf16 %v46, %v45
    %v50 = vpack.c.bf16 %v48, %v47
    %v51 = vld [vmem:[%s2] sm:$0xf]
    %v52 = vld [vmem:[%s2 + $0x4] sm:$0xf]
    %v53 = vld [vmem:[%s2 + $0x8] sm:$0xf]
    %v54 = vld [vmem:[%s2 + $0xc] sm:$0xf]
    %v55 = vld [vmem:[#allocation2] sm:$0xf]
    %v56 = vld [vmem:[#allocation2 + $0x4] sm:$0xf]
    %v57 = vld [vmem:[#allocation2 + $0x8] sm:$0xf]
    %v58 = vld [vmem:[#allocation2 + $0xc] sm:$0xf]
    %v63 = vunpack.c.l.b16 %v55
    %v64 = vunpack.c.l.b16 %v56
    %v65 = vunpack.c.l.b16 %v57
    %v66 = vunpack.c.l.b16 %v58
    %v67 = vpack.c.b16 %v64, %v63
    %v68 = vpack.c.b16 %v66, %v65
    %vm71 = vcmask 261120
    %v73 = vsel %vm71, %v50, 0
    %75 = vmatprep.subr.bf16.mxu0 0
    %76 = vmatpush1.bf16.msra.mxu0 0
    %77 = vmatprep.subr.bf16.mxu0 0
    %78 = vmatpush1.bf16.msra.mxu0 0
    %79 = vmatprep.subr.bf16.mxu0 0
    %80 = vmatpush1.bf16.msra.mxu0 0
    %81 = vmatprep.subr.bf16.mxu0 0
    %82 = vmatpush1.bf16.msra.mxu0 0
    %83 = vmatprep.subr.bf16.mxu0 0
    %84 = vmatpush1.bf16.msra.mxu0 0
    %85 = vmatprep.subr.bf16.mxu0 0
    %86 = vmatpush1.bf16.msra.mxu0 0
    %87 = vmatprep.subr.bf16.mxu0 0
    %88 = vmatpush1.bf16.msra.mxu0 %v68
    %89 = vmatprep.subr.bf16.mxu0 0
    %90 = vmatpush1.bf16.msra.mxu0 %v67
    %91 = vmatprep.subr.bf16.mxu0 0
    %92 = vmatpush2.bf16.msra.mxu0 0
    %93 = vmatprep.subr.bf16.mxu0 0
    %94 = vmatpush2.bf16.msra.mxu0 0
    %95 = vmatprep.subr.bf16.mxu0 0
    %96 = vmatpush2.bf16.msra.mxu0 0
    %97 = vmatprep.subr.bf16.mxu0 0
    %98 = vmatpush2.bf16.msra.mxu0 0
    %99 = vmatprep.subr.bf16.mxu0 0
    %100 = vmatpush2.bf16.msra.mxu0 0
    %101 = vmatprep.subr.bf16.mxu0 0
    %102 = vmatpush2.bf16.msra.mxu0 0
    %103 = vmatprep.subr.bf16.mxu0 0
    %104 = vmatpush2.bf16.msra.mxu0 0
    %105 = vmatprep.subr.bf16.mxu0 0
    %106 = vmatpush2.bf16.msra.mxu0 0
    %107 = vmatprep.mubr.bf16.mxu0 0
    %108 = vmatmul.mubr.bf16.gmra.mxu0 %v73
    %v109 = vpop.f32.mrf.mxu0
    %v110 = vadd.f32 0.0, %v109
    %v111 = vpop.f32.mrf.mxu0
    %v112 = vpop.f32.mrf.mxu0
    %v113 = vadd.f32 0.0, %v112
    %v114 = vpop.f32.mrf.mxu0
    %115 = vdwg.mxu0
    %v120 = vunpack.c.l.b16 %v51
    %v121 = vunpack.c.l.b16 %v52
    %v122 = vunpack.c.l.b16 %v53
    %v123 = vunpack.c.l.b16 %v54
    %v124 = vpack.c.b16 %v121, %v120
    %v125 = vpack.c.b16 %v123, %v122
    %v129 = vsel %vm71, %v49, 0
    %131 = vmatprep.subr.bf16.mxu0 0
    %132 = vmatpush1.bf16.msra.mxu0 0
    %133 = vmatprep.subr.bf16.mxu0 0
    %134 = vmatpush1.bf16.msra.mxu0 0
    %135 = vmatprep.subr.bf16.mxu0 0
    %136 = vmatpush1.bf16.msra.mxu0 0
    %137 = vmatprep.subr.bf16.mxu0 0
    %138 = vmatpush1.bf16.msra.mxu0 0
    %139 = vmatprep.subr.bf16.mxu0 0
    %140 = vmatpush1.bf16.msra.mxu0 0
    %141 = vmatprep.subr.bf16.mxu0 0
    %142 = vmatpush1.bf16.msra.mxu0 0
    %143 = vmatprep.subr.bf16.mxu0 0
    %144 = vmatpush1.bf16.msra.mxu0 %v125
    %145 = vmatprep.subr.bf16.mxu0 0
    %146 = vmatpush1.bf16.msra.mxu0 %v124
    %147 = vmatprep.subr.bf16.mxu0 0
    %148 = vmatpush2.bf16.msra.mxu0 0
    %149 = vmatprep.subr.bf16.mxu0 0
    %150 = vmatpush2.bf16.msra.mxu0 0
    %151 = vmatprep.subr.bf16.mxu0 0
    %152 = vmatpush2.bf16.msra.mxu0 0
    %153 = vmatprep.subr.bf16.mxu0 0
    %154 = vmatpush2.bf16.msra.mxu0 0
    %155 = vmatprep.subr.bf16.mxu0 0
    %156 = vmatpush2.bf16.msra.mxu0 0
    %157 = vmatprep.subr.bf16.mxu0 0
    %158 = vmatpush2.bf16.msra.mxu0 0
    %159 = vmatprep.subr.bf16.mxu0 0
    %160 = vmatpush2.bf16.msra.mxu0 0
    %161 = vmatprep.subr.bf16.mxu0 0
    %162 = vmatpush2.bf16.msra.mxu0 0
    %163 = vmatprep.mubr.bf16.mxu0 0
    %164 = vmatmul.mubr.bf16.gmra.mxu0 %v129
    %v165 = vpop.f32.mrf.mxu0
    %v166 = vadd.f32 %v110, %v165
    %v167 = vpop.f32.mrf.mxu0
    %v168 = vpop.f32.mrf.mxu0
    %v169 = vadd.f32 %v113, %v168
    %v170 = vpop.f32.mrf.mxu0
    %171 = vdwg.mxu0
    %v172 = vld [vmem:[%s4] sm:$0x1]
    %v174 = vlaneseq
    %v175 = vshrl.u32 %v174, 7
    %v176 = vsub.s32 0, %v175
    %v177 = vrot.slane %v172, %v176
    %v179 = vadd.f32 %v166, %v177
    %v180 = vadd.f32 %v169, %v177
    %v181 = vmax.f32 %v179, 0.0
    %v182 = vmax.f32 %v180, 0.0
    %v183 = vpack.c.bf16 %v182, %v181
    %v184 = vld [vmem:[%s5] sm:$0xf]
    %v185 = vld [vmem:[%s5 + $0x4] sm:$0xf]
    %v186 = vld [vmem:[%s5 + $0x8] sm:$0xf]
    %v187 = vld [vmem:[%s5 + $0xc] sm:$0xf]
    %v188 = vld [vmem:[%s5 + $0x10] sm:$0xf]
    %v189 = vld [vmem:[%s5 + $0x14] sm:$0xf]
    %v190 = vld [vmem:[%s5 + $0x18] sm:$0xf]
    %v191 = vld [vmem:[%s5 + $0x1c] sm:$0xf]
    %v192 = vld [vmem:[%s6] sm:$0x1]
    %v194 = vlaneseq
    %v195 = vshrl.u32 %v194, 7
    %v196 = vsub.s32 0, %v195
    %v197 = vrot.slane %v192, %v196
    %v207 = vunpack.c.l.b16 %v184
    %v208 = vunpack.c.l.b16 %v185
    %v209 = vunpack.c.l.b16 %v186
    %v210 = vunpack.c.l.b16 %v187
    %v211 = vunpack.c.l.b16 %v188
    %v212 = vunpack.c.l.b16 %v189
    %v213 = vunpack.c.l.b16 %v190
    %v214 = vunpack.c.l.b16 %v191
    %v215 = vpack.c.b16 %v208, %v207
    %v216 = vpack.c.b16 %v210, %v209
    %v217 = vpack.c.b16 %v212, %v211
    %v218 = vpack.c.b16 %v214, %v213
    %vm223 = vcmask 523264
    %v225 = vsel %vm223, %v183, 0
    %227 = vmatprep.subr.bf16.mxu0 0
    %228 = vmatpush1.bf16.msra.mxu0 0
    %229 = vmatprep.subr.bf16.mxu0 0
    %230 = vmatpush1.bf16.msra.mxu0 0
    %231 = vmatprep.subr.bf16.mxu0 0
    %232 = vmatpush1.bf16.msra.mxu0 0
    %233 = vmatprep.subr.bf16.mxu0 0
    %234 = vmatpush1.bf16.msra.mxu0 0
    %235 = vmatprep.subr.bf16.mxu0 0
    %236 = vmatpush1.bf16.msra.mxu0 %v218
    %237 = vmatprep.subr.bf16.mxu0 0
    %238 = vmatpush1.bf16.msra.mxu0 %v217
    %239 = vmatprep.subr.bf16.mxu0 0
    %240 = vmatpush1.bf16.msra.mxu0 %v216
    %241 = vmatprep.subr.bf16.mxu0 0
    %242 = vmatpush1.bf16.msra.mxu0 %v215
    %243 = vmatprep.subr.bf16.mxu0 0
    %244 = vmatpush2.bf16.msra.mxu0 0
    %245 = vmatprep.subr.bf16.mxu0 0
    %246 = vmatpush2.bf16.msra.mxu0 0
    %247 = vmatprep.subr.bf16.mxu0 0
    %248 = vmatpush2.bf16.msra.mxu0 0
    %249 = vmatprep.subr.bf16.mxu0 0
    %250 = vmatpush2.bf16.msra.mxu0 0
    %251 = vmatprep.subr.bf16.mxu0 0
    %252 = vmatpush2.bf16.msra.mxu0 0
    %253 = vmatprep.subr.bf16.mxu0 0
    %254 = vmatpush2.bf16.msra.mxu0 0
    %255 = vmatprep.subr.bf16.mxu0 0
    %256 = vmatpush2.bf16.msra.mxu0 0
    %257 = vmatprep.subr.bf16.mxu0 0
    %258 = vmatpush2.bf16.msra.mxu0 0
    %259 = vmatprep.mubr.bf16.mxu0 0
    %260 = vmatmul.mubr.bf16.gmra.mxu0 %v225
    %v261 = vpop.f32.mrf.mxu0
    %v262 = vadd.f32 %v197, %v261
    %v263 = vpop.f32.mrf.mxu0
    %v264 = vpop.f32.mrf.mxu0
    %v265 = vadd.f32 %v197, %v264
    %v266 = vpop.f32.mrf.mxu0
    %267 = vdwg.mxu0
    %v268 = vsel %vm71, %v262, -inf
    %v269 = vrot.slane %v268, 4
    %v270 = vmax.f32 %v268, %v269
    %v271 = vrot.slane %v270, 2
    %v272 = vmax.f32 %v270, %v271
    %v273 = vrot.slane %v272, 1
    %v274 = vmax.f32 %v272, %v273
    %v275 = vsel %vm71, %v265, -inf
    %v276 = vrot.slane %v275, 4
    %v277 = vmax.f32 %v275, %v276
    %v278 = vrot.slane %v277, 2
    %v279 = vmax.f32 %v277, %v278
    %v280 = vrot.slane %v279, 1
    %v281 = vmax.f32 %v279, %v280
    %v282 = vsub.f32 %v262, %v274
    %v283 = vsub.f32 %v265, %v281
    %v284 = vmul.f32 %v282, 1.442695
    %v285 = vpow.pop %v284
    %v286 = vmul.f32 %v283, 1.442695
    %v287 = vpow.pop %v286
    %v288 = vsel %vm71, %v285, 0.0
    %v289 = vrot.slane %v288, 4
    %v290 = vadd.f32 %v288, %v289
    %v291 = vrot.slane %v290, 2
    %v292 = vadd.f32 %v290, %v291
    %v293 = vrot.slane %v292, 1
    %v294 = vadd.f32 %v292, %v293
    %v295 = vsel %vm71, %v287, 0.0
    %v296 = vrot.slane %v295, 4
    %v297 = vadd.f32 %v295, %v296
    %v298 = vrot.slane %v297, 2
    %v299 = vadd.f32 %v297, %v298
    %v300 = vrot.slane %v299, 1
    %v301 = vadd.f32 %v299, %v300
    %v302 = vrcp.pop %v294
    %v303 = vrcp.pop %v301
    %v304 = vmul.f32 %v285, %v302
    %v305 = vmul.f32 %v287, %v303
    %v306 = vmul.f32 %v304, %v45
    %v307 = vmul.f32 %v305, %v46
    %v308 = vsel %vm71, %v306, 0.0
    %v309 = vrot.slane %v308, 4
    %v310 = vadd.f32 %v308, %v309
    %v311 = vrot.slane %v310, 2
    %v312 = vadd.f32 %v310, %v311
    %v313 = vrot.slane %v312, 1
    %v314 = vadd.f32 %v312, %v313
    %v315 = vsel %vm71, %v307, 0.0
    %v316 = vrot.slane %v315, 4
    %v317 = vadd.f32 %v315, %v316
    %v318 = vrot.slane %v317, 2
    %v319 = vadd.f32 %v317, %v318
    %v320 = vrot.slane %v319, 1
    %v321 = vadd.f32 %v319, %v320
    %vm324 = vcmask 1041409
    %v325 = vsel %vm324, %v321, %v314
    %vm327 = vcmask 254976
    %328 = vst.msk [vmem:[#allocation5] sm:$0x3] %vm327, %v325
    %v329 = vmul.f32 %v304, %v47
    %v330 = vmul.f32 %v305, %v48
    %v331 = vsel %vm71, %v329, 0.0
    %v332 = vrot.slane %v331, 4
    %v333 = vadd.f32 %v331, %v332
    %v334 = vrot.slane %v333, 2
    %v335 = vadd.f32 %v333, %v334
    %v336 = vrot.slane %v335, 1
    %v337 = vadd.f32 %v335, %v336
    %v338 = vsel %vm71, %v330, 0.0
    %v339 = vrot.slane %v338, 4
    %v340 = vadd.f32 %v338, %v339
    %v341 = vrot.slane %v340, 2
    %v342 = vadd.f32 %v340, %v341
    %v343 = vrot.slane %v342, 1
    %v344 = vadd.f32 %v342, %v343
    %v347 = vsel %vm324, %v344, %v337
    %349 = vst.msk [vmem:[#allocation6] sm:$0x3] %vm327, %v347
    // Predicated region
    $region34: #{beta_intersection.1} parent=1 // pred_check
      _
    $region35: #{beta_intersection.1} parent=1 // pred_check_branch
      %351 = sbr.rel (0) target = $region37
    $region36: #{beta_intersection.1} parent=1 // pred_region
      %s353 = ssub.s32 32, 32
      %354 = vsyncadd [#allocation4], %s353
      %s356 = sshll.u32 [#allocation5], 4
      %s357 = int_to_ptr.vmem [resolvable:$true] %s356
      %359 = dma.vmem_to_hbm [thread:$0]  %s357, 32, %s7, [#allocation4]
    $region37: #{beta_intersection.1} parent=1 // pred_fallthru
      _
    // Predicated region
    $region38: #{beta_intersection.1} parent=1 // pred_check
      _
    $region39: #{beta_intersection.1} parent=1 // pred_check_branch
      %361 = sbr.rel (0) target = $region41
    $region40: #{beta_intersection.1} parent=1 // pred_region
      %s363 = ssub.s32 32, 32
      %364 = vsyncadd [#allocation7], %s363
      %s366 = sshll.u32 [#allocation6], 4
      %s367 = int_to_ptr.vmem [resolvable:$true] %s366
      %369 = dma.vmem_to_hbm [thread:$0]  %s367, 32, %s8, [#allocation7]
    $region41: #{beta_intersection.1} parent=1 // pred_fallthru
      _
    // Predicated region
    $region42: #{beta_intersection.1} parent=1 // pred_check
      _
    $region43: #{beta_intersection.1} parent=1 // pred_check_branch
      %371 = sbr.rel (0) target = $region45
    $region44: #{beta_intersection.1} parent=1 // pred_region
      %372 = dma.done [#allocation4], 32
    $region45: #{beta_intersection.1} parent=1 // pred_fallthru
      _
    // Predicated region
    $region46: #{beta_intersection.1} parent=1 // pred_check
      _
    $region47: #{beta_intersection.1} parent=1 // pred_check_branch
      %374 = sbr.rel (0) target = $region49
    $region48: #{beta_intersection.1} parent=1 // pred_region
      %375 = dma.done [#allocation7], 32
    $region49: #{beta_intersection.1} parent=1 // pred_fallthru
      _
    %376 = vsyncpa [#allocation3], 1
    %377 = vsyncpa [#allocation4], 1
    %378 = vsyncpa [#allocation7], 1

</llo_original>
